<compile_context>
chip_gen: v6e
topology: v6e:2x2x1
jax: 0.10.0
libtpu: 0.0.40
codegen_flags: <defaults>
</compile_context>

<pallas_src>
import functools

import jax
import jax.numpy as jnp
from jax import lax
from jax.experimental import pallas as pl
from jax.experimental.pallas import tpu as pltpu


# Conservative scratch budget: fits v7x's 64 MiB physical VMEM with headroom,
# trivially fits v5e/v6e's 128 MiB.
_VMEM_BUDGET_BYTES = 40 * 1024 * 1024


def _round_up(x, m):
    return ((x + m - 1) // m) * m


def _to_2tuple(v):
    return tuple(v) if isinstance(v, (tuple, list)) else (v, v)


def _patch_embed_kernel(x_ref, w_ref, b_ref, o_ref):
    # x_ref: (TM, Kp) streamed patch tile
    # w_ref: (Kp, Ep) projection weight (VMEM-resident, single-buffered)
    # b_ref: (1,  Ep) bias, f32          (VMEM-resident, single-buffered)
    # o_ref: (TM, Ep)
    acc = jnp.dot(x_ref[...], w_ref[...], preferred_element_type=jnp.float32)
    o_ref[...] = (acc + b_ref[...]).astype(o_ref.dtype)


@functools.partial(
    jax.jit,
    static_argnames=("patch_size", "tm", "cast_to_bf16", "out_dtype",
                     "fuse_patch_extraction"),
)
def _patch_embed_pallas(x, weight, bias, patch_size, *, tm, cast_to_bf16,
                        out_dtype, fuse_patch_extraction):
    B, C, H, W = x.shape
    ph, pw = patch_size
    E = weight.shape[0]
    gh, gw = H // ph, W // pw
    num_patches = gh * gw
    K = C * ph * pw
    M = B * num_patches

    out_dtype = jnp.dtype(out_dtype) if out_dtype is not None else jnp.dtype(x.dtype)

    if cast_to_bf16:
        # cast before the transpose so the materialized patch matrix is bf16
        x = x.astype(jnp.bfloat16)
        weight = weight.astype(jnp.bfloat16)

    # --- layout glue (no compute): non-overlapping patches -> dense (M, K) ---
    # (B, C, gh, ph, gw, pw) -> (B, gh, gw, C, ph, pw) -> (M, K)
    patches = x.reshape(B, C, gh, ph, gw, pw)
    patches = jnp.transpose(patches, (0, 2, 4, 1, 3, 5)).reshape(M, K)

    # conv weight (E, C, ph, pw) -> matmul weight (K, E); feature order (C, ph, pw)
    w_mat = weight.reshape(E, K).T
    b_mat = bias.reshape(1, E).astype(jnp.float32)  # bias add stays f32

    # --- pad K/E to 128: dense MXU tiles + unmasked lane-dense output stores.
    # NOTE: padded K columns MUST be real zeros (they multiply into real rows);
    # garbage in any partial trailing M block is safe (those rows are masked).
    Kp = _round_up(K, 128)
    Ep = _round_up(E, 128)
    if Kp != K:
        patches = jnp.pad(patches, ((0, 0), (0, Kp - K)))
    if Kp != K or Ep != E:
        w_mat = jnp.pad(w_mat, ((0, Kp - K), (0, Ep - E)))
    if Ep != E:
        b_mat = jnp.pad(b_mat, ((0, 0), (0, Ep - E)))

    in_bytes = patches.dtype.itemsize
    out_bytes = out_dtype.itemsize

    # --- M tiling ---
    # bf16 packs two rows per sublane -> 16-row granularity; f32 -> 8.
    sub = 16 if (in_bytes == 2 or out_bytes == 2) else 8
    # Cap at ~ceil(M/2) so the parallel M axis has >= 2 grid steps (v7x dual TC).
    tm_eff = min(_round_up(tm, sub), _round_up(pl.cdiv(M, 2), sub))
    tm_eff = max(tm_eff, sub)
    if tm_eff >= M:
        tm_eff = M  # single full-extent block is always a legal block shape

    # VMEM budget: 2x buffers for the streamed patch/output tiles, single-
    # buffered resident weight + bias.
    def _vmem_need(t):
        return (Kp * Ep * in_bytes            # resident weight (Buffered(1))
                + Ep * 4                      # resident bias (f32)
                + 2 * t * Kp * in_bytes       # double-buffered patch tiles
                + 2 * t * Ep * out_bytes)     # double-buffered output tiles

    while tm_eff > sub and _vmem_need(tm_eff) > _VMEM_BUDGET_BYTES:
        tm_eff = max(sub, _round_up(tm_eff // 2, sub))

    # Raise the scoped VMEM limit to match the tiles (v5e default is only 16 MiB),
    # but stay well under v7x's 64 MiB physical VMEM.
    vmem_limit = int(min(max(_vmem_need(tm_eff) + (8 << 20), 32 << 20), 56 << 20))

    grid = (pl.cdiv(M, tm_eff),)

    out = pl.pallas_call(
        _patch_embed_kernel,
        out_shape=jax.ShapeDtypeStruct((M, Ep), out_dtype),
        grid_spec=pltpu.PrefetchScalarGridSpec(
            num_scalar_prefetch=0,
            grid=grid,
            in_specs=[
                # streamed patch tiles (double-buffered by the pipeline)
                pl.BlockSpec((tm_eff, Kp), lambda i: (i, 0)),
                # projection weight: constant index_map -> VMEM-resident,
                # single-buffered (no prefetch-ahead needed).
                pl.BlockSpec((Kp, Ep), lambda i: (0, 0),
                             pipeline_mode=pl.Buffered(1)),
                # bias: resident, single-buffered
                pl.BlockSpec((1, Ep), lambda i: (0, 0),
                             pipeline_mode=pl.Buffered(1)),
            ],
            out_specs=pl.BlockSpec((tm_eff, Ep), lambda i: (i, 0)),
        ),
        compiler_params=pltpu.CompilerParams(
            dimension_semantics=("parallel",),
            vmem_limit_bytes=vmem_limit,
            # Default: materialize the dense (M,K) patch matrix with one XLA
            # transpose pass so the kernel input streams row-major at HBM
            # roofline, instead of risking a pw-element-granule gather DMA.
            allow_input_fusion=[True, False, False] if fuse_patch_extraction else None,
        ),
    )(patches, w_mat, b_mat)

    if Ep != E:
        out = out[:, :E]
    return out.reshape(B, num_patches, E)


@functools.partial(jax.jit, static_argnames=("patch_size",))
def _patch_embed_xla(x, weight, bias, patch_size):
    # Fallback for tiny K/E where padding lanes to 128 wastes >= 4x work.
    B = x.shape[0]
    E = weight.shape[0]
    y = lax.conv_general_dilated(
        x, weight, window_strides=patch_size, padding="VALID",
        dimension_numbers=("NCHW", "OIHW", "NCHW"),
    ) + bias.reshape(1, E, 1, 1)
    return y.reshape(B, E, -1).transpose(0, 2, 1)


def patch_embed(x, weight, bias, patch_size, *, tm=512, cast_to_bf16=True,
                out_dtype=None, use_pallas=None, fuse_patch_extraction=False):
    """x: (B, C, H, W); weight: (E, C, ph, pw); bias: (E,) -> (B, num_patches, E)."""
    ph, pw = _to_2tuple(patch_size)
    B, C, H, W = x.shape
    if H % ph != 0 or W % pw != 0:
        raise ValueError(f"image size ({H},{W}) not divisible by patch size ({ph},{pw})")
    E = weight.shape[0]
    K = C * ph * pw
    if use_pallas is None:
        # Only dispatch the Pallas kernel at dims where the 128-lane padding is
        # naturally dense; tiny layers go to XLA's conv.
        use_pallas = (K >= 128 and E >= 128)
    if not use_pallas:
        return _patch_embed_xla(x, weight, bias, (ph, pw))
    return _patch_embed_pallas(
        x, weight, bias, (ph, pw), tm=tm, cast_to_bf16=cast_to_bf16,
        out_dtype=out_dtype, fuse_patch_extraction=fuse_patch_extraction)


if __name__ == "__main__":
    # Small shapes consistent with the module's forward:
    # img_size=16, patch_size=4, in_chans=4, embed_dim=32
    B, C, H, W = 2, 4, 16, 16
    ph = pw = 4
    E = 32

    key = jax.random.PRNGKey(0)
    kx, kw, kb = jax.random.split(key, 3)
    x = jax.random.normal(kx, (B, C, H, W), dtype=jnp.float32)
    weight = jax.random.normal(kw, (E, C, ph, pw), dtype=jnp.float32) * 0.02
    bias = jax.random.normal(kb, (E,), dtype=jnp.float32) * 0.02

    # Reference: strided conv (PyTorch Conv2d semantics) -> flatten(2).transpose(1,2)
    ref = lax.conv_general_dilated(
        x, weight, window_strides=(ph, pw), padding="VALID",
        dimension_numbers=("NCHW", "OIHW", "NCHW"),
    ) + bias.reshape(1, E, 1, 1)
    ref = ref.reshape(B, E, -1).transpose(0, 2, 1)

    np_patches = (H // ph) * (W // pw)

    # Force the Pallas path (auto-dispatch would route this tiny K=64/E=32 layer
    # to XLA) so the kernel itself is exercised on-device.

    # 1) f32 streaming path: directly comparable to the f32 conv reference.
    out_f32 = patch_embed(x, weight, bias, (ph, pw),
                          cast_to_bf16=False, use_pallas=True)
    out_f32 = jax.block_until_ready(out_f32)
    assert out_f32.shape == (B, np_patches, E), out_f32.shape
    assert jnp.allclose(out_f32, ref, atol=1e-4, rtol=1e-4), \
        "f32 path mismatch vs conv reference"

    # 2) default bf16 streaming path (f32 accumulation): looser tolerance for
    #    the expected bf16 input quantization.
    out_bf16 = patch_embed(x, weight, bias, (ph, pw), use_pallas=True)
    out_bf16 = jax.block_until_ready(out_bf16)
    assert out_bf16.shape == (B, np_patches, E), out_bf16.shape
    assert jnp.allclose(out_bf16, ref, atol=3e-2, rtol=3e-2), \
        "bf16 path mismatch vs conv reference"

    print("KERNEL_OK")
</pallas_src>

<mosaic_0001>
module attributes {stable_mosaic.version = 11 : i64} {
  func.func @_patch_embed_kernel(%arg0: i32, %arg1: memref<16x128xf32, #tpu.memory_space<vmem>>, %arg2: memref<128x128xf32, #tpu.memory_space<vmem>>, %arg3: memref<1x128xf32, #tpu.memory_space<vmem>>, %arg4: memref<16x128xf32, #tpu.memory_space<vmem>>) attributes {dimension_semantics = [#tpu.dimension_semantics<parallel>], iteration_bounds = array<i64: 2>, scalar_prefetch = 0 : i64, scratch_operands = 0 : i64, tpu.core_type = #tpu.core_type<tc>, window_params = [{transform_indices = @transform_0, window_bounds = array<i64: 16, 128>}, {pipeline_mode = #tpu.pipeline_mode<synchronous>, transform_indices = @transform_1, window_bounds = array<i64: 128, 128>}, {pipeline_mode = #tpu.pipeline_mode<synchronous>, transform_indices = @transform_2, window_bounds = array<i64: 1, 128>}, {transform_indices = @transform_3, window_bounds = array<i64: 16, 128>}]} {
    %c0 = arith.constant 0 : index
    %c0_0 = arith.constant 0 : index
    %0 = vector.load %arg1[%c0, %c0_0] : memref<16x128xf32, #tpu.memory_space<vmem>>, vector<16x128xf32>
    %c0_1 = arith.constant 0 : index
    %c0_2 = arith.constant 0 : index
    %1 = vector.load %arg2[%c0_1, %c0_2] : memref<128x128xf32, #tpu.memory_space<vmem>>, vector<128x128xf32>
    %cst = arith.constant dense<0.000000e+00> : vector<16x128xf32>
    %2 = tpu.matmul %0, %1, %cst {dimension_numbers = #tpu.dot_dimension_numbers<[1], [0], [0], [1], [0, 0, 1, 1], [], []>} : vector<16x128xf32>, vector<128x128xf32>, vector<16x128xf32> -> vector<16x128xf32>
    %c0_3 = arith.constant 0 : index
    %c0_4 = arith.constant 0 : index
    %3 = vector.load %arg3[%c0_3, %c0_4] : memref<1x128xf32, #tpu.memory_space<vmem>>, vector<1x128xf32>
    %4 = vector.broadcast %3 : vector<1x128xf32> to vector<16x128xf32>
    %5 = arith.addf %2, %4 : vector<16x128xf32>
    %c0_5 = arith.constant 0 : index
    %c0_6 = arith.constant 0 : index
    %6 = vector.load %arg4[%c0_5, %c0_6] : memref<16x128xf32, #tpu.memory_space<vmem>>, vector<16x128xf32>
    tpu.vector_store %arg4[%c0_5, %c0_6], %5 {strides = array<i32>} : memref<16x128xf32, #tpu.memory_space<vmem>>, vector<16x128xf32>,
    return
  }
  func.func @transform_0(%arg0: i32) -> (i32, i32) {
    %c0_i32 = arith.constant 0 : i32
    %c0_i32_0 = arith.constant 0 : i32
    return %arg0, %c0_i32 : i32, i32
  }
  func.func @transform_1(%arg0: i32) -> (i32, i32) {
    %c0_i32 = arith.constant 0 : i32
    %c0_i32_0 = arith.constant 0 : i32
    %c0_i32_1 = arith.constant 0 : i32
    return %c0_i32, %c0_i32_0 : i32, i32
  }
  func.func @transform_2(%arg0: i32) -> (i32, i32) {
    %c0_i32 = arith.constant 0 : i32
    %c0_i32_0 = arith.constant 0 : i32
    %c0_i32_1 = arith.constant 0 : i32
    return %c0_i32, %c0_i32_0 : i32, i32
  }
  func.func @transform_3(%arg0: i32) -> (i32, i32) {
    %c0_i32 = arith.constant 0 : i32
    %c0_i32_0 = arith.constant 0 : i32
    return %arg0, %c0_i32 : i32, i32
  }
}

</mosaic_0001>

<llo_original>
// kernel: _patch_embed_pallas.1
$region0: #{_patch_embed_pallas.1}
  #allocation0 [shape = 'u32[]', space=smem, size = 0x4, offset = 0x4, fixed_abs, tag = 'smem constant byte address 0x4 - core index']
  #allocation1 [shape = 'u32[144,128]{1,0:T(1,128)}', space=vmem, size = 0x12000, scoped, tag = 'internal scratch']
  %s0 = inlined_call_operand.vmem [shape: f32[32,128], index: 0, kind: input, shape index: {}]
  %s1 = inlined_call_operand.vmem [shape: f32[128,128], index: 1, kind: input, shape index: {}]
  %s2 = inlined_call_operand.vmem [shape: f32[1,128], index: 2, kind: input, shape index: {}]
  %s3 = inlined_call_operand.hbm [shape: f32[32,128], index: 3, kind: output, shape index: {}]
  %s4 = sld [smem:[#allocation0]]
  $region45: #{_patch_embed_pallas.1} parent=0
    _
  %s6 = ssub.s32 1, %s4
  %s7 = scalar_select 0, %s6, %s4
  $region1: #{_patch_embed_pallas.1} parent=0
    #allocation2 [shape = 'u8[16384]{0}', space=vmem, size = 0x4000, scoped, tag = 'output window, operand 0']
    #allocation3 [shape = 's32[2]{0}', space=sflag, size = 0x8, scoped, tag = 'scoped memory for _patch_embed_pallas.1']
    %8 = vsyncpa [#allocation3], 0
    %s9 = scalar_lea.sflag [#allocation3], 1
    %10 = vsyncpa %s9, 0
    loop: start=0, step=1, limit=4
    $region2: #{_patch_embed_pallas.1} parent=1 // loop_pre_header
      _
    $region3: #{_patch_embed_pallas.1} parent=1 // loop_header
      %s12 = sphi 0, %s16
      %p13 = scmp.ge.s32.totalorder %s12, 4
      %s22 = sphi 0, %s24
      %s25 = sphi 0, %s22
      %s26 = sphi 0, %s25
      %s42 = sphi 0, %s26
      %s46 = sphi 0, %s46
      %s48 = sphi 0, %s46
      %s49 = sphi 0, %s48
      %s63 = sphi 0, %s49
      %s67 = sphi 0, %s67
      %s69 = sphi 0, %s67
      %s70 = sphi 0, %s69
      %s84 = sphi 0, %s70
      %s90 = sphi 0, %s92
      %s93 = sphi 0, %s90
      %s94 = sphi 0, %s93
      %s110 = sphi 0, %s94
    $region4: #{_patch_embed_pallas.1} parent=1 // loop_header_branch
      %15 = sbr.rel (%p13) target = $region8
    $region5: #{_patch_embed_pallas.1} parent=1 // loop_body
      %s17 = ssub.s32 %s12, 1
      %s18 = ssub.s32 %s12, 2
      %s19 = sadd.s32 %s12, 1
      %s20 = ssub.s32 %s12, %s19
      %p21 = scmp.eq.s32.totalorder %s20, 0
      %s23 = sadd.s32 %s22, 1
      %s24 = scalar_select %p21, %s22, %s23
      %p27 = pneg %p21
      %p28 = scmp.eq.s32.totalorder %s12, 1
      %p29 = por %p27, %p28
      %p30 = scmp.ne.s32.totalorder %s22, %s25
      %p31 = scmp.eq.s32.totalorder %s12, 0
      %p32 = por %p30, %p31
      %p33 = scmp.ne.s32.totalorder %s22, %s25
      %p34 = scmp.eq.s32.totalorder %s17, 1
      %p35 = por %p33, %p34
      %p36 = scmp.ne.s32.totalorder %s25, %s26
      %p37 = scmp.eq.s32.totalorder %s17, 0
      %p38 = por %p36, %p37
      %p39 = scmp.ne.s32.totalorder %s25, %s26
      %p40 = scmp.eq.s32.totalorder %s18, 1
      %p41 = por %p39, %p40
      %p43 = scmp.ne.s32.totalorder %s26, %s42
      %p44 = scmp.eq.s32.totalorder %s18, 0
      %p45 = por %p43, %p44
      %s47 = sadd.s32 %s46, 1
      %p50 = scmp.eq.s32.totalorder %s12, 1
      %p51 = scmp.ne.s32.totalorder %s46, %s48
      %p52 = scmp.eq.s32.totalorder %s12, 0
      %p53 = por %p51, %p52
      %p54 = scmp.ne.s32.totalorder %s46, %s48
      %p55 = scmp.eq.s32.totalorder %s17, 1
      %p56 = por %p54, %p55
      %p57 = scmp.ne.s32.totalorder %s48, %s49
      %p58 = scmp.eq.s32.totalorder %s17, 0
      %p59 = por %p57, %p58
      %p60 = scmp.ne.s32.totalorder %s48, %s49
      %p61 = scmp.eq.s32.totalorder %s18, 1
      %p62 = por %p60, %p61
      %p64 = scmp.ne.s32.totalorder %s49, %s63
      %p65 = scmp.eq.s32.totalorder %s18, 0
      %p66 = por %p64, %p65
      %s68 = sadd.s32 %s67, 1
      %p71 = scmp.eq.s32.totalorder %s12, 1
      %p72 = scmp.ne.s32.totalorder %s67, %s69
      %p73 = scmp.eq.s32.totalorder %s12, 0
      %p74 = por %p72, %p73
      %p75 = scmp.ne.s32.totalorder %s67, %s69
      %p76 = scmp.eq.s32.totalorder %s17, 1
      %p77 = por %p75, %p76
      %p78 = scmp.ne.s32.totalorder %s69, %s70
      %p79 = scmp.eq.s32.totalorder %s17, 0
      %p80 = por %p78, %p79
      %p81 = scmp.ne.s32.totalorder %s69, %s70
      %p82 = scmp.eq.s32.totalorder %s18, 1
      %p83 = por %p81, %p82
      %p85 = scmp.ne.s32.totalorder %s70, %s84
      %p86 = scmp.eq.s32.totalorder %s18, 0
      %p87 = por %p85, %p86
      %s88 = ssub.s32 %s12, %s19
      %p89 = scmp.eq.s32.totalorder %s88, 0
      %s91 = sadd.s32 %s90, 1
      %s92 = scalar_select %p89, %s90, %s91
      %p95 = pneg %p89
      %p96 = scmp.eq.s32.totalorder %s12, 1
      %p97 = por %p95, %p96
      %p98 = scmp.ne.s32.totalorder %s90, %s93
      %p99 = scmp.eq.s32.totalorder %s12, 0
      %p100 = por %p98, %p99
      %p101 = scmp.ne.s32.totalorder %s90, %s93
      %p102 = scmp.eq.s32.totalorder %s17, 1
      %p103 = por %p101, %p102
      %p104 = scmp.ne.s32.totalorder %s93, %s94
      %p105 = scmp.eq.s32.totalorder %s17, 0
      %p106 = por %p104, %p105
      %p107 = scmp.ne.s32.totalorder %s93, %s94
      %p108 = scmp.eq.s32.totalorder %s18, 1
      %p109 = por %p107, %p108
      %p111 = scmp.ne.s32.totalorder %s94, %s110
      %p112 = scmp.eq.s32.totalorder %s18, 0
      %p113 = por %p111, %p112
      %p114 = scmp.le.s32.totalorder 1, %s12
      %p115 = scmp.lt.s32.totalorder %s12, 3
      %p116 = pnand %p114, %p115
      %p117 = pneg %p116
      // Predicated region
      $region9: #{_patch_embed_pallas.1} parent=5 // pred_check
        _
      $region10: #{_patch_embed_pallas.1} parent=5 // pred_check_branch
        %119 = sbr.rel (%p116) target = $region12
      $region11: #{_patch_embed_pallas.1} parent=5 // pred_region
        %s120 = ssub.s32 %s12, 1
        // Predicated region
        $region13: #{_patch_embed_pallas.1} parent=11 // pred_check
          %p121 = pneg %p59
        $region14: #{_patch_embed_pallas.1} parent=11 // pred_check_branch
          %123 = sbr.rel (%p121) target = $region16
        $region15: #{_patch_embed_pallas.1} parent=11 // pred_region
          _
        $region16: #{_patch_embed_pallas.1} parent=11 // pred_fallthru
          _
        // Predicated region
        $region17: #{_patch_embed_pallas.1} parent=11 // pred_check
          %p124 = pneg %p80
        $region18: #{_patch_embed_pallas.1} parent=11 // pred_check_branch
          %126 = sbr.rel (%p124) target = $region20
        $region19: #{_patch_embed_pallas.1} parent=11 // pred_region
          _
        $region20: #{_patch_embed_pallas.1} parent=11 // pred_fallthru
          _
      $region12: #{_patch_embed_pallas.1} parent=5 // pred_fallthru
        _
      %p127 = scmp.lt.s32.totalorder %s12, 2
      // Predicated region
      $region21: #{_patch_embed_pallas.1} parent=5 // pred_check
        %p128 = pneg %p127
      $region22: #{_patch_embed_pallas.1} parent=5 // pred_check_branch
        %130 = sbr.rel (%p128) target = $region24
      $region23: #{_patch_embed_pallas.1} parent=5 // pred_region
        // Predicated region
        $region25: #{_patch_embed_pallas.1} parent=23 // pred_check
          %p131 = pneg %p32
        $region26: #{_patch_embed_pallas.1} parent=23 // pred_check_branch
          %133 = sbr.rel (%p131) target = $region28
        $region27: #{_patch_embed_pallas.1} parent=23 // pred_region
          %s134 = smul.u32 2, %s12
          %p135 = scmp.lt.s32.totalorder %s134, 3
          %s136 = scalar_select %p135, %s134, 3
          %s137 = smul.addr %s136, 8
          %s138 = scalar_lea.vmem %s0, %s137
          %s139 = smul.u32 2, %s12
        $region28: #{_patch_embed_pallas.1} parent=23 // pred_fallthru
          _
      $region24: #{_patch_embed_pallas.1} parent=5 // pred_fallthru
        _
      %p140 = scmp.le.s32.totalorder 1, %s12
      %p141 = scmp.lt.s32.totalorder %s12, 3
      %p142 = pnand %p140, %p141
      %p143 = pneg %p142
      // Predicated region
      $region29: #{_patch_embed_pallas.1} parent=5 // pred_check
        _
      $region30: #{_patch_embed_pallas.1} parent=5 // pred_check_branch
        %145 = sbr.rel (%p142) target = $region32
      $region31: #{_patch_embed_pallas.1} parent=5 // pred_region
        %s146 = ssub.s32 %s12, 1
        %s147 = smul.u32 2, %s17
        %p148 = scmp.lt.s32.totalorder %s147, 3
        %s149 = scalar_select %p148, %s147, 3
        %s150 = smul.addr %s149, 8
        %s151 = scalar_lea.vmem %s0, %s150
        %p152 = pneg %p38
        %p153 = pneg %p35
        %p154 = pneg %p59
        %p155 = pneg %p56
        %p156 = pneg %p80
        %p157 = pneg %p77
        %p158 = pneg %p106
        %p159 = pneg %p103
        %s160 = sand.u32 %s93, 1
        %s161 = scalar_lea.sflag [#allocation3], %s160
        %s162 = sand.u32 %s93, 1
        %s163 = smul.addr %s162, 16
        %s164 = scalar_lea.vmem [#allocation2], %s163
        %s165 = smul.u32 2, %s17
        %p166 = scmp.lt.s32.totalorder %s165, 3
        %s167 = scalar_select %p166, %s165, 3
        %s168 = smul.addr %s167, 8
        %s169 = scalar_lea.vmem %s0, %s168
        %s170 = smul.u32 2, %s17
        %s171 = smul.u32 2, %s17
        %v172 = vld [vmem:[%s169] sm:$0xff]
        %v173 = vld [vmem:[%s169 + $0x8] sm:$0xff]
        %v174 = vld [vmem:[%s1] sm:$0xff]
        %v175 = vld [vmem:[%s1 + $0x8] sm:$0xff]
        %v176 = vld [vmem:[%s1 + $0x10] sm:$0xff]
        %v177 = vld [vmem:[%s1 + $0x18] sm:$0xff]
        %v178 = vld [vmem:[%s1 + $0x20] sm:$0xff]
        %v179 = vld [vmem:[%s1 + $0x28] sm:$0xff]
        %v180 = vld [vmem:[%s1 + $0x30] sm:$0xff]
        %v181 = vld [vmem:[%s1 + $0x38] sm:$0xff]
        %v182 = vld [vmem:[%s1 + $0x40] sm:$0xff]
        %v183 = vld [vmem:[%s1 + $0x48] sm:$0xff]
        %v184 = vld [vmem:[%s1 + $0x50] sm:$0xff]
        %v185 = vld [vmem:[%s1 + $0x58] sm:$0xff]
        %v186 = vld [vmem:[%s1 + $0x60] sm:$0xff]
        %v187 = vld [vmem:[%s1 + $0x68] sm:$0xff]
        %v188 = vld [vmem:[%s1 + $0x70] sm:$0xff]
        %v189 = vld [vmem:[%s1 + $0x78] sm:$0xff]
        %v190 = vld [vmem:[%s2] sm:$0x1]
        %v192 = vlaneseq
        %v193 = vshrl.u32 %v192, 7
        %v194 = vsub.s32 0, %v193
        %v195 = vrot.slane %v190, %v194
        %197 = vmatprep.subr.mxu0 0.0
        %198 = vmatpush1.msra.mxu0 %v189
        %199 = vmatprep.subr.mxu0 0.0
        %200 = vmatpush1.msra.mxu0 %v188
        %201 = vmatprep.subr.mxu0 0.0
        %202 = vmatpush1.msra.mxu0 %v187
        %203 = vmatprep.subr.mxu0 0.0
        %204 = vmatpush1.msra.mxu0 %v186
        %205 = vmatprep.subr.mxu0 0.0
        %206 = vmatpush1.msra.mxu0 %v185
        %207 = vmatprep.subr.mxu0 0.0
        %208 = vmatpush1.msra.mxu0 %v184
        %209 = vmatprep.subr.mxu0 0.0
        %210 = vmatpush1.msra.mxu0 %v183
        %211 = vmatprep.subr.mxu0 0.0
        %212 = vmatpush1.msra.mxu0 %v182
        %213 = vmatprep.subr.mxu0 0.0
        %214 = vmatpush1.msra.mxu0 %v181
        %215 = vmatprep.subr.mxu0 0.0
        %216 = vmatpush1.msra.mxu0 %v180
        %217 = vmatprep.subr.mxu0 0.0
        %218 = vmatpush1.msra.mxu0 %v179
        %219 = vmatprep.subr.mxu0 0.0
        %220 = vmatpush1.msra.mxu0 %v178
        %221 = vmatprep.subr.mxu0 0.0
        %222 = vmatpush1.msra.mxu0 %v177
        %223 = vmatprep.subr.mxu0 0.0
        %224 = vmatpush1.msra.mxu0 %v176
        %225 = vmatprep.subr.mxu0 0.0
        %226 = vmatpush1.msra.mxu0 %v175
        %227 = vmatprep.subr.mxu0 0.0
        %228 = vmatpush1.msra.mxu0 %v174
        %229 = vmatprep.subr.mxu0 0.0
        %230 = vmatpush2.msra.mxu0 0.0
        %231 = vmatprep.subr.mxu0 0.0
        %232 = vmatpush2.msra.mxu0 0.0
        %233 = vmatprep.subr.mxu0 0.0
        %234 = vmatpush2.msra.mxu0 0.0
        %235 = vmatprep.subr.mxu0 0.0
        %236 = vmatpush2.msra.mxu0 0.0
        %237 = vmatprep.subr.mxu0 0.0
        %238 = vmatpush2.msra.mxu0 0.0
        %239 = vmatprep.subr.mxu0 0.0
        %240 = vmatpush2.msra.mxu0 0.0
        %241 = vmatprep.subr.mxu0 0.0
        %242 = vmatpush2.msra.mxu0 0.0
        %243 = vmatprep.subr.mxu0 0.0
        %244 = vmatpush2.msra.mxu0 0.0
        %245 = vmatprep.subr.mxu0 0.0
        %246 = vmatpush2.msra.mxu0 0.0
        %247 = vmatprep.subr.mxu0 0.0
        %248 = vmatpush2.msra.mxu0 0.0
        %249 = vmatprep.subr.mxu0 0.0
        %250 = vmatpush2.msra.mxu0 0.0
        %251 = vmatprep.subr.mxu0 0.0
        %252 = vmatpush2.msra.mxu0 0.0
        %253 = vmatprep.subr.mxu0 0.0
        %254 = vmatpush2.msra.mxu0 0.0
        %255 = vmatprep.subr.mxu0 0.0
        %256 = vmatpush2.msra.mxu0 0.0
        %257 = vmatprep.subr.mxu0 0.0
        %258 = vmatpush2.msra.mxu0 0.0
        %259 = vmatprep.subr.mxu0 0.0
        %260 = vmatpush2.msra.mxu0 0.0
        %261 = vmatprep.mubr.f32.mxu0 0.0
        %262 = vmatmul.mubr.f32.gmra.mxu0 %v172
        %v263 = vpop.f32.mrf.mxu0
        %v264 = vadd.f32 %v195, %v263
        %v265 = vpop.f32.mrf.mxu0
        %266 = vmatprep.mubr.f32.mxu0 0.0
        %267 = vmatmul.mubr.f32.gmra.mxu0 %v173
        %v268 = vpop.f32.mrf.mxu0
        %v269 = vadd.f32 %v195, %v268
        %v270 = vpop.f32.mrf.mxu0
        %271 = vdwg.mxu0
        %272 = vst [vmem:[%s164] sm:$0xff] %v264
        %273 = vst [vmem:[%s164 + $0x8] sm:$0xff] %v269
        %s274 = sand.u32 %s93, 1
        %s275 = scalar_lea.sflag [#allocation3], %s274
        %s276 = sand.u32 %s93, 1
        %s277 = smul.addr %s276, 16
        %s278 = scalar_lea.vmem [#allocation2], %s277
        // Predicated region
        $region33: #{_patch_embed_pallas.1} parent=31 // pred_check
          %p279 = pneg %p103
        $region34: #{_patch_embed_pallas.1} parent=31 // pred_check_branch
          %281 = sbr.rel (%p279) target = $region36
        $region35: #{_patch_embed_pallas.1} parent=31 // pred_region
          %s282 = smul.u32 2, %s17
          %s284 = ssub.s32 256, 256
          %285 = vsyncadd %s275, %s284
          %s286 = smul.addr %s282, 128
          %s287 = scalar_lea.hbm %s3, %s286
          %s288 = sshll.u32 %s278, 4
          %s289 = int_to_ptr.vmem [resolvable:$true] %s288
          %294 = dma.vmem_to_hbm [thread:$0]  %s289, 256, %s287, %s275, 128, 128, 8
        $region36: #{_patch_embed_pallas.1} parent=31 // pred_fallthru
          _
      $region32: #{_patch_embed_pallas.1} parent=5 // pred_fallthru
        _
      %p295 = scmp.le.s32.totalorder 2, %s12
      // Predicated region
      $region37: #{_patch_embed_pallas.1} parent=5 // pred_check
        %p296 = pneg %p295
      $region38: #{_patch_embed_pallas.1} parent=5 // pred_check_branch
        %298 = sbr.rel (%p296) target = $region40
      $region39: #{_patch_embed_pallas.1} parent=5 // pred_region
        %s299 = ssub.s32 %s12, 2
        // Predicated region
        $region41: #{_patch_embed_pallas.1} parent=39 // pred_check
          %p300 = pneg %p109
        $region42: #{_patch_embed_pallas.1} parent=39 // pred_check_branch
          %302 = sbr.rel (%p300) target = $region44
        $region43: #{_patch_embed_pallas.1} parent=39 // pred_region
          %s303 = sand.u32 %s94, 1
          %s304 = scalar_lea.sflag [#allocation3], %s303
          %s305 = sand.u32 %s94, 1
          %s306 = smul.addr %s305, 16
          %s307 = scalar_lea.vmem [#allocation2], %s306
          %308 = dma.done %s304, 256
        $region44: #{_patch_embed_pallas.1} parent=39 // pred_fallthru
          _
      $region40: #{_patch_embed_pallas.1} parent=5 // pred_fallthru
        _
    $region6: #{_patch_embed_pallas.1} parent=1 // loop_footer
      %s16 = sadd.s32 1, %s12
    $region7: #{_patch_embed_pallas.1} parent=1 // loop_footer_branch
      %11 = sbr.rel target = $region3
    $region8: #{_patch_embed_pallas.1} parent=1 // loop_exit
      _
    %309 = vsyncpa [#allocation3], 1
    %s310 = scalar_lea.sflag [#allocation3], 1
    %311 = vsyncpa %s310, 1

</llo_original>
